<compile_context>
chip_gen: v7x
topology: tpu7x:2x2x1
jax: 0.10.0
libtpu: 0.0.40
codegen_flags: <defaults>
</compile_context>

<pallas_src>
import jax
import jax.numpy as jnp
from jax import lax
from jax.experimental import pallas as pl
from jax.experimental.pallas import tpu as pltpu


def bottleneck_kernel(x_ref, w1_ref, s1_ref, b1_ref,
                      w2_ref, s2_ref, b2_ref,
                      w3_ref, s3_ref, b3_ref,
                      out_ref):
    # x_ref: (1, H, W, Cin) with Cin == 4 * P (identity residual)
    _, H, W, Cin = x_ref.shape
    P = w1_ref.shape[1]

    xf = x_ref[0].reshape(H * W, Cin)                       # (HW, Cin) f32

    # ---- conv1 (1x1) + bn1 + relu -----------------------------------------
    h1 = jnp.dot(xf.astype(jnp.bfloat16), w1_ref[...],
                 preferred_element_type=jnp.float32)        # (HW, P)
    h1 = jnp.maximum(h1 * s1_ref[...] + b1_ref[...], 0.0)

    # ---- conv2 (3x3, pad=1, stride=1) + bn2 + relu ------------------------
    # value-level zero padding (no VMEM scratch, no full-buffer zero-fill),
    # then one im2col matmul with K = 9*P.
    h1_img = h1.reshape(H, W, P)
    zr = jnp.zeros((1, W, P), jnp.float32)
    hp = jnp.concatenate([zr, h1_img, zr], axis=0)          # (H+2, W, P)
    zc = jnp.zeros((H + 2, 1, P), jnp.float32)
    hp = jnp.concatenate([zc, hp, zc], axis=1)              # (H+2, W+2, P)

    cols = [hp[ki:ki + H, kj:kj + W, :].reshape(H * W, P)
            for ki in range(3) for kj in range(3)]
    patches = jnp.concatenate(cols, axis=-1)                # (HW, 9P) f32
    h2 = jnp.dot(patches.astype(jnp.bfloat16), w2_ref[...],
                 preferred_element_type=jnp.float32)        # (HW, P)
    h2 = jnp.maximum(h2 * s2_ref[...] + b2_ref[...], 0.0)

    # ---- conv3 (1x1) + bn3 + residual + relu ------------------------------
    h3 = jnp.dot(h2.astype(jnp.bfloat16), w3_ref[...],
                 preferred_element_type=jnp.float32)        # (HW, 4P)
    h3 = h3 * s3_ref[...] + b3_ref[...]
    res = x_ref[0].reshape(H * W, Cin)                      # reload residual (f32)
    out = jnp.maximum(h3 + res, 0.0)
    out_ref[...] = out.reshape(1, H, W, Cin).astype(out_ref.dtype)


def bottleneck_pallas(x_nchw, p):
    x = jnp.transpose(x_nchw, (0, 2, 3, 1)).astype(jnp.float32)  # NHWC
    N, H, W, Cin = x.shape
    P = p["w1"].shape[1]
    Cout = p["w3"].shape[1]

    grid_spec = pltpu.PrefetchScalarGridSpec(
        num_scalar_prefetch=0,
        grid=(N,),
        in_specs=[
            pl.BlockSpec((1, H, W, Cin), lambda n: (n, 0, 0, 0)),   # x
            pl.BlockSpec((Cin, P),       lambda n: (0, 0)),          # w1
            pl.BlockSpec((1, P),         lambda n: (0, 0)),          # s1
            pl.BlockSpec((1, P),         lambda n: (0, 0)),          # b1
            pl.BlockSpec((9 * P, P),     lambda n: (0, 0)),          # w2 (im2col)
            pl.BlockSpec((1, P),         lambda n: (0, 0)),          # s2
            pl.BlockSpec((1, P),         lambda n: (0, 0)),          # b2
            pl.BlockSpec((P, Cout),      lambda n: (0, 0)),          # w3
            pl.BlockSpec((1, Cout),      lambda n: (0, 0)),          # s3
            pl.BlockSpec((1, Cout),      lambda n: (0, 0)),          # b3
        ],
        out_specs=pl.BlockSpec((1, H, W, Cout), lambda n: (n, 0, 0, 0)),
    )

    out_nhwc = pl.pallas_call(
        bottleneck_kernel,
        out_shape=jax.ShapeDtypeStruct((N, H, W, Cout), jnp.float32),
        grid_spec=grid_spec,
        compiler_params=pltpu.CompilerParams(
            dimension_semantics=("parallel",),        # megacore on v7x
            vmem_limit_bytes=32 * 1024 * 1024,        # safe on v5e/v6e/v7x budgets
        ),
    )(x, p["w1"], p["s1"], p["b1"],
      p["w2"], p["s2"], p["b2"],
      p["w3"], p["s3"], p["b3"])
    return jnp.transpose(out_nhwc, (0, 3, 1, 2))  # back to NCHW


# --------------------------- pure-JAX reference -----------------------------
# Matches the kernel's numerics: bf16 conv inputs, f32 accumulation, f32 BN/ReLU,
# f32 identity residual.
def bottleneck_reference(x, raw):
    eps = 1e-5
    dn = ("NCHW", "OIHW", "NCHW")

    def conv(y, w, pad):
        return lax.conv_general_dilated(
            y.astype(jnp.bfloat16), w.astype(jnp.bfloat16), (1, 1), pad,
            dimension_numbers=dn, preferred_element_type=jnp.float32)

    def bn(y, g, b, m, v):
        g, b, m, v = (t[None, :, None, None] for t in (g, b, m, v))
        return (y - m) / jnp.sqrt(v + eps) * g + b

    y = jax.nn.relu(bn(conv(x, raw["w1_oihw"], "VALID"), *raw["bn1"]))
    y = jax.nn.relu(bn(conv(y, raw["w2_oihw"], ((1, 1), (1, 1))), *raw["bn2"]))
    y = bn(conv(y, raw["w3_oihw"], "VALID"), *raw["bn3"])
    return jax.nn.relu(y + x)


def make_params(key, inplanes, planes):
    eps = 1e-5
    ks = jax.random.split(key, 8)

    def bn_params(k, c):
        k1, k2, k3, k4 = jax.random.split(k, 4)
        gamma = 1.0 + 0.1 * jax.random.normal(k1, (c,), jnp.float32)
        beta = 0.1 * jax.random.normal(k2, (c,), jnp.float32)
        mean = 0.1 * jax.random.normal(k3, (c,), jnp.float32)
        var = 0.5 + 0.5 * jnp.abs(jax.random.normal(k4, (c,), jnp.float32))
        return gamma, beta, mean, var

    w1_oihw = 0.2 * jax.random.normal(ks[0], (planes, inplanes, 1, 1), jnp.float32)
    w2_oihw = 0.2 * jax.random.normal(ks[1], (planes, planes, 3, 3), jnp.float32)
    w3_oihw = 0.2 * jax.random.normal(ks[2], (planes * 4, planes, 1, 1), jnp.float32)
    bn1 = bn_params(ks[3], planes)
    bn2 = bn_params(ks[4], planes)
    bn3 = bn_params(ks[5], planes * 4)

    raw = {"w1_oihw": w1_oihw, "w2_oihw": w2_oihw, "w3_oihw": w3_oihw,
           "bn1": bn1, "bn2": bn2, "bn3": bn3}

    def fold(bn):
        g, b, m, v = bn
        s = g / jnp.sqrt(v + eps)
        return s.reshape(1, -1), (b - m * s).reshape(1, -1)

    s1, b1 = fold(bn1)
    s2, b2 = fold(bn2)
    s3, b3 = fold(bn3)

    p = {
        # matmul weights in bf16 (f32 MXU accumulation inside the kernel)
        "w1": w1_oihw[:, :, 0, 0].T.astype(jnp.bfloat16),                 # (Cin, P)
        "w2": jnp.transpose(w2_oihw, (2, 3, 1, 0))
                 .reshape(9 * planes, planes).astype(jnp.bfloat16),       # (9P, P), (kh,kw,cin) major
        "w3": w3_oihw[:, :, 0, 0].T.astype(jnp.bfloat16),                 # (P, 4P)
        # folded BN scale/bias kept in f32
        "s1": s1, "b1": b1, "s2": s2, "b2": b2, "s3": s3, "b3": b3,
    }
    return p, raw


if __name__ == "__main__":
    planes = 32
    inplanes = planes * 4          # identity residual path requires inplanes == 4*planes
    N, H, W = 2, 8, 8              # small, but channels are lane-dense (128)

    key = jax.random.PRNGKey(0)
    kx, kp = jax.random.split(key)
    x = jax.random.normal(kx, (N, inplanes, H, W), jnp.float32)   # NCHW like PyTorch

    params, raw = make_params(kp, inplanes, planes)

    out = jax.jit(bottleneck_pallas)(x, params)
    out = jax.block_until_ready(out)

    ref = bottleneck_reference(x, raw)
    assert out.shape == ref.shape == (N, inplanes, H, W)
    max_err = float(jnp.max(jnp.abs(out - ref)))
    assert jnp.allclose(out, ref, rtol=2e-3, atol=2e-3), max_err

    print("KERNEL_OK")
</pallas_src>

<mosaic_0001>
module attributes {stable_mosaic.version = 11 : i64} {
  func.func @bottleneck_kernel(%arg0: i32, %arg1: memref<1x8x8x128xf32, #tpu.memory_space<vmem>>, %arg2: memref<128x32xbf16, #tpu.memory_space<vmem>>, %arg3: memref<1x32xf32, #tpu.memory_space<vmem>>, %arg4: memref<1x32xf32, #tpu.memory_space<vmem>>, %arg5: memref<288x32xbf16, #tpu.memory_space<vmem>>, %arg6: memref<1x32xf32, #tpu.memory_space<vmem>>, %arg7: memref<1x32xf32, #tpu.memory_space<vmem>>, %arg8: memref<32x128xbf16, #tpu.memory_space<vmem>>, %arg9: memref<1x128xf32, #tpu.memory_space<vmem>>, %arg10: memref<1x128xf32, #tpu.memory_space<vmem>>, %arg11: memref<1x8x8x128xf32, #tpu.memory_space<vmem>>) attributes {dimension_semantics = [#tpu.dimension_semantics<parallel>], iteration_bounds = array<i64: 2>, scalar_prefetch = 0 : i64, scratch_operands = 0 : i64, tpu.core_type = #tpu.core_type<tc>, window_params = [{transform_indices = @transform_0, window_bounds = array<i64: 1, 8, 8, 128>}, {pipeline_mode = #tpu.pipeline_mode<synchronous>, transform_indices = @transform_1, window_bounds = array<i64: 128, 32>}, {pipeline_mode = #tpu.pipeline_mode<synchronous>, transform_indices = @transform_2, window_bounds = array<i64: 1, 32>}, {pipeline_mode = #tpu.pipeline_mode<synchronous>, transform_indices = @transform_3, window_bounds = array<i64: 1, 32>}, {pipeline_mode = #tpu.pipeline_mode<synchronous>, transform_indices = @transform_4, window_bounds = array<i64: 288, 32>}, {pipeline_mode = #tpu.pipeline_mode<synchronous>, transform_indices = @transform_5, window_bounds = array<i64: 1, 32>}, {pipeline_mode = #tpu.pipeline_mode<synchronous>, transform_indices = @transform_6, window_bounds = array<i64: 1, 32>}, {pipeline_mode = #tpu.pipeline_mode<synchronous>, transform_indices = @transform_7, window_bounds = array<i64: 32, 128>}, {pipeline_mode = #tpu.pipeline_mode<synchronous>, transform_indices = @transform_8, window_bounds = array<i64: 1, 128>}, {pipeline_mode = #tpu.pipeline_mode<synchronous>, transform_indices = @transform_9, window_bounds = array<i64: 1, 128>}, {transform_indices = @transform_10, window_bounds = array<i64: 1, 8, 8, 128>}]} {
    %c0 = arith.constant 0 : index
    %c0_0 = arith.constant 0 : index
    %c0_1 = arith.constant 0 : index
    %c0_2 = arith.constant 0 : index
    %0 = vector.load %arg1[%c0, %c0_0, %c0_1, %c0_2] : memref<1x8x8x128xf32, #tpu.memory_space<vmem>>, vector<1x8x8x128xf32>
    %1 = vector.shape_cast %0 : vector<1x8x8x128xf32> to vector<8x8x128xf32>
    %2 = vector.shape_cast %1 : vector<8x8x128xf32> to vector<64x128xf32>
    %3 = arith.truncf %2 : vector<64x128xf32> to vector<64x128xbf16>
    %c0_3 = arith.constant 0 : index
    %c0_4 = arith.constant 0 : index
    %4 = vector.load %arg2[%c0_3, %c0_4] : memref<128x32xbf16, #tpu.memory_space<vmem>>, vector<128x32xbf16>
    %cst = arith.constant dense<0.000000e+00> : vector<64x32xf32>
    %5 = tpu.matmul %3, %4, %cst {dimension_numbers = #tpu.dot_dimension_numbers<[1], [0], [0], [1], [0, 0, 1, 1], [], []>} : vector<64x128xbf16>, vector<128x32xbf16>, vector<64x32xf32> -> vector<64x32xf32>
    %c0_5 = arith.constant 0 : index
    %c0_6 = arith.constant 0 : index
    %6 = vector.load %arg3[%c0_5, %c0_6] : memref<1x32xf32, #tpu.memory_space<vmem>>, vector<1x32xf32>
    %7 = vector.broadcast %6 : vector<1x32xf32> to vector<64x32xf32>
    %8 = arith.mulf %5, %7 : vector<64x32xf32>
    %c0_7 = arith.constant 0 : index
    %c0_8 = arith.constant 0 : index
    %9 = vector.load %arg4[%c0_7, %c0_8] : memref<1x32xf32, #tpu.memory_space<vmem>>, vector<1x32xf32>
    %10 = vector.broadcast %9 : vector<1x32xf32> to vector<64x32xf32>
    %11 = arith.addf %8, %10 : vector<64x32xf32>
    %cst_9 = arith.constant 0.000000e+00 : f32
    %12 = vector.broadcast %cst_9 : f32 to vector<64x32xf32>
    %13 = arith.maximumf %11, %12 : vector<64x32xf32>
    %14 = vector.shape_cast %13 : vector<64x32xf32> to vector<8x8x32xf32>
    %cst_10 = arith.constant 0.000000e+00 : f32
    %15 = vector.broadcast %cst_10 : f32 to vector<1x8x32xf32>
    %16 = tpu.concatenate %15, %14, %15 in 0 : vector<1x8x32xf32>, vector<8x8x32xf32>, vector<1x8x32xf32> -> vector<10x8x32xf32>
    %cst_11 = arith.constant 0.000000e+00 : f32
    %17 = vector.broadcast %cst_11 : f32 to vector<10x1x32xf32>
    %18 = tpu.concatenate %17, %16, %17 in 1 : vector<10x1x32xf32>, vector<10x8x32xf32>, vector<10x1x32xf32> -> vector<10x10x32xf32>
    %19 = vector.extract_strided_slice %18 {offsets = [0, 0, 0], sizes = [8, 8, 32], strides = [1, 1, 1]} : vector<10x10x32xf32> to vector<8x8x32xf32>
    %20 = vector.shape_cast %19 : vector<8x8x32xf32> to vector<64x32xf32>
    %21 = vector.extract_strided_slice %18 {offsets = [0, 1, 0], sizes = [8, 8, 32], strides = [1, 1, 1]} : vector<10x10x32xf32> to vector<8x8x32xf32>
    %22 = vector.shape_cast %21 : vector<8x8x32xf32> to vector<64x32xf32>
    %23 = vector.extract_strided_slice %18 {offsets = [0, 2, 0], sizes = [8, 8, 32], strides = [1, 1, 1]} : vector<10x10x32xf32> to vector<8x8x32xf32>
    %24 = vector.shape_cast %23 : vector<8x8x32xf32> to vector<64x32xf32>
    %25 = vector.extract_strided_slice %18 {offsets = [1, 0, 0], sizes = [8, 8, 32], strides = [1, 1, 1]} : vector<10x10x32xf32> to vector<8x8x32xf32>
    %26 = vector.shape_cast %25 : vector<8x8x32xf32> to vector<64x32xf32>
    %27 = vector.extract_strided_slice %18 {offsets = [1, 1, 0], sizes = [8, 8, 32], strides = [1, 1, 1]} : vector<10x10x32xf32> to vector<8x8x32xf32>
    %28 = vector.shape_cast %27 : vector<8x8x32xf32> to vector<64x32xf32>
    %29 = vector.extract_strided_slice %18 {offsets = [1, 2, 0], sizes = [8, 8, 32], strides = [1, 1, 1]} : vector<10x10x32xf32> to vector<8x8x32xf32>
    %30 = vector.shape_cast %29 : vector<8x8x32xf32> to vector<64x32xf32>
    %31 = vector.extract_strided_slice %18 {offsets = [2, 0, 0], sizes = [8, 8, 32], strides = [1, 1, 1]} : vector<10x10x32xf32> to vector<8x8x32xf32>
    %32 = vector.shape_cast %31 : vector<8x8x32xf32> to vector<64x32xf32>
    %33 = vector.extract_strided_slice %18 {offsets = [2, 1, 0], sizes = [8, 8, 32], strides = [1, 1, 1]} : vector<10x10x32xf32> to vector<8x8x32xf32>
    %34 = vector.shape_cast %33 : vector<8x8x32xf32> to vector<64x32xf32>
    %35 = vector.extract_strided_slice %18 {offsets = [2, 2, 0], sizes = [8, 8, 32], strides = [1, 1, 1]} : vector<10x10x32xf32> to vector<8x8x32xf32>
    %36 = vector.shape_cast %35 : vector<8x8x32xf32> to vector<64x32xf32>
    %37 = tpu.concatenate %20, %22, %24, %26, %28, %30, %32, %34, %36 in 1 : vector<64x32xf32>, vector<64x32xf32>, vector<64x32xf32>, vector<64x32xf32>, vector<64x32xf32>, vector<64x32xf32>, vector<64x32xf32>, vector<64x32xf32>, vector<64x32xf32> -> vector<64x288xf32>
    %38 = arith.truncf %37 : vector<64x288xf32> to vector<64x288xbf16>
    %c0_12 = arith.constant 0 : index
    %c0_13 = arith.constant 0 : index
    %39 = vector.load %arg5[%c0_12, %c0_13] : memref<288x32xbf16, #tpu.memory_space<vmem>>, vector<288x32xbf16>
    %cst_14 = arith.constant dense<0.000000e+00> : vector<64x32xf32>
    %40 = tpu.matmul %38, %39, %cst_14 {dimension_numbers = #tpu.dot_dimension_numbers<[1], [0], [0], [1], [0, 0, 1, 1], [], []>} : vector<64x288xbf16>, vector<288x32xbf16>, vector<64x32xf32> -> vector<64x32xf32>
    %c0_15 = arith.constant 0 : index
    %c0_16 = arith.constant 0 : index
    %41 = vector.load %arg6[%c0_15, %c0_16] : memref<1x32xf32, #tpu.memory_space<vmem>>, vector<1x32xf32>
    %42 = vector.broadcast %41 : vector<1x32xf32> to vector<64x32xf32>
    %43 = arith.mulf %40, %42 : vector<64x32xf32>
    %c0_17 = arith.constant 0 : index
    %c0_18 = arith.constant 0 : index
    %44 = vector.load %arg7[%c0_17, %c0_18] : memref<1x32xf32, #tpu.memory_space<vmem>>, vector<1x32xf32>
    %45 = vector.broadcast %44 : vector<1x32xf32> to vector<64x32xf32>
    %46 = arith.addf %43, %45 : vector<64x32xf32>
    %cst_19 = arith.constant 0.000000e+00 : f32
    %47 = vector.broadcast %cst_19 : f32 to vector<64x32xf32>
    %48 = arith.maximumf %46, %47 : vector<64x32xf32>
    %49 = arith.truncf %48 : vector<64x32xf32> to vector<64x32xbf16>
    %c0_20 = arith.constant 0 : index
    %c0_21 = arith.constant 0 : index
    %50 = vector.load %arg8[%c0_20, %c0_21] : memref<32x128xbf16, #tpu.memory_space<vmem>>, vector<32x128xbf16>
    %cst_22 = arith.constant dense<0.000000e+00> : vector<64x128xf32>
    %51 = tpu.matmul %49, %50, %cst_22 {dimension_numbers = #tpu.dot_dimension_numbers<[1], [0], [0], [1], [0, 0, 1, 1], [], []>} : vector<64x32xbf16>, vector<32x128xbf16>, vector<64x128xf32> -> vector<64x128xf32>
    %c0_23 = arith.constant 0 : index
    %c0_24 = arith.constant 0 : index
    %52 = vector.load %arg9[%c0_23, %c0_24] : memref<1x128xf32, #tpu.memory_space<vmem>>, vector<1x128xf32>
    %53 = vector.broadcast %52 : vector<1x128xf32> to vector<64x128xf32>
    %54 = arith.mulf %51, %53 : vector<64x128xf32>
    %c0_25 = arith.constant 0 : index
    %c0_26 = arith.constant 0 : index
    %55 = vector.load %arg10[%c0_25, %c0_26] : memref<1x128xf32, #tpu.memory_space<vmem>>, vector<1x128xf32>
    %56 = vector.broadcast %55 : vector<1x128xf32> to vector<64x128xf32>
    %57 = arith.addf %54, %56 : vector<64x128xf32>
    %c0_27 = arith.constant 0 : index
    %c0_28 = arith.constant 0 : index
    %c0_29 = arith.constant 0 : index
    %c0_30 = arith.constant 0 : index
    %58 = vector.load %arg1[%c0_27, %c0_28, %c0_29, %c0_30] : memref<1x8x8x128xf32, #tpu.memory_space<vmem>>, vector<1x8x8x128xf32>
    %59 = vector.shape_cast %58 : vector<1x8x8x128xf32> to vector<8x8x128xf32>
    %60 = vector.shape_cast %59 : vector<8x8x128xf32> to vector<64x128xf32>
    %61 = arith.addf %57, %60 : vector<64x128xf32>
    %cst_31 = arith.constant 0.000000e+00 : f32
    %62 = vector.broadcast %cst_31 : f32 to vector<64x128xf32>
    %63 = arith.maximumf %61, %62 : vector<64x128xf32>
    %64 = vector.shape_cast %63 : vector<64x128xf32> to vector<1x8x8x128xf32>
    %c0_32 = arith.constant 0 : index
    %c0_33 = arith.constant 0 : index
    %c0_34 = arith.constant 0 : index
    %c0_35 = arith.constant 0 : index
    %65 = vector.load %arg11[%c0_32, %c0_33, %c0_34, %c0_35] : memref<1x8x8x128xf32, #tpu.memory_space<vmem>>, vector<1x8x8x128xf32>
    tpu.vector_store %arg11[%c0_32, %c0_33, %c0_34, %c0_35], %64 {strides = array<i32>} : memref<1x8x8x128xf32, #tpu.memory_space<vmem>>, vector<1x8x8x128xf32>,
    return
  }
  func.func @transform_0(%arg0: i32) -> (i32, i32, i32, i32) {
    %c0_i32 = arith.constant 0 : i32
    %c0_i32_0 = arith.constant 0 : i32
    %c0_i32_1 = arith.constant 0 : i32
    %c0_i32_2 = arith.constant 0 : i32
    return %arg0, %c0_i32, %c0_i32_0, %c0_i32_1 : i32, i32, i32, i32
  }
  func.func @transform_1(%arg0: i32) -> (i32, i32) {
    %c0_i32 = arith.constant 0 : i32
    %c0_i32_0 = arith.constant 0 : i32
    %c0_i32_1 = arith.constant 0 : i32
    return %c0_i32, %c0_i32_0 : i32, i32
  }
  func.func @transform_2(%arg0: i32) -> (i32, i32) {
    %c0_i32 = arith.constant 0 : i32
    %c0_i32_0 = arith.constant 0 : i32
    %c0_i32_1 = arith.constant 0 : i32
    return %c0_i32, %c0_i32_0 : i32, i32
  }
  func.func @transform_3(%arg0: i32) -> (i32, i32) {
    %c0_i32 = arith.constant 0 : i32
    %c0_i32_0 = arith.constant 0 : i32
    %c0_i32_1 = arith.constant 0 : i32
    return %c0_i32, %c0_i32_0 : i32, i32
  }
  func.func @transform_4(%arg0: i32) -> (i32, i32) {
    %c0_i32 = arith.constant 0 : i32
    %c0_i32_0 = arith.constant 0 : i32
    %c0_i32_1 = arith.constant 0 : i32
    return %c0_i32, %c0_i32_0 : i32, i32
  }
  func.func @transform_5(%arg0: i32) -> (i32, i32) {
    %c0_i32 = arith.constant 0 : i32
    %c0_i32_0 = arith.constant 0 : i32
    %c0_i32_1 = arith.constant 0 : i32
    return %c0_i32, %c0_i32_0 : i32, i32
  }
  func.func @transform_6(%arg0: i32) -> (i32, i32) {
    %c0_i32 = arith.constant 0 : i32
    %c0_i32_0 = arith.constant 0 : i32
    %c0_i32_1 = arith.constant 0 : i32
    return %c0_i32, %c0_i32_0 : i32, i32
  }
  func.func @transform_7(%arg0: i32) -> (i32, i32) {
    %c0_i32 = arith.constant 0 : i32
    %c0_i32_0 = arith.constant 0 : i32
    %c0_i32_1 = arith.constant 0 : i32
    return %c0_i32, %c0_i32_0 : i32, i32
  }
  func.func @transform_8(%arg0: i32) -> (i32, i32) {
    %c0_i32 = arith.constant 0 : i32
    %c0_i32_0 = arith.constant 0 : i32
    %c0_i32_1 = arith.constant 0 : i32
    return %c0_i32, %c0_i32_0 : i32, i32
  }
  func.func @transform_9(%arg0: i32) -> (i32, i32) {
    %c0_i32 = arith.constant 0 : i32
    %c0_i32_0 = arith.constant 0 : i32
    %c0_i32_1 = arith.constant 0 : i32
    return %c0_i32, %c0_i32_0 : i32, i32
  }
  func.func @transform_10(%arg0: i32) -> (i32, i32, i32, i32) {
    %c0_i32 = arith.constant 0 : i32
    %c0_i32_0 = arith.constant 0 : i32
    %c0_i32_1 = arith.constant 0 : i32
    %c0_i32_2 = arith.constant 0 : i32
    return %arg0, %c0_i32, %c0_i32_0, %c0_i32_1 : i32, i32, i32, i32
  }
}

</mosaic_0001>

<llo_original>
// kernel: bottleneck_pallas.1
$region0: #{bottleneck_pallas.1}
  #allocation0 [shape = 'u32[]', space=smem, size = 0x4, offset = 0x4, fixed_abs, tag = 'smem constant byte address 0x4 - core index']
  #allocation1 [shape = 'u32[144,128]{1,0:T(1,128)}', space=vmem, size = 0x12000, scoped, tag = 'internal scratch']
  %s0 = inlined_call_operand.vmem [shape: f32[2,8,8,128], index: 0, kind: input, shape index: {}]
  %s1 = inlined_call_operand.vmem [shape: bf16[128,32], index: 1, kind: input, shape index: {}]
  %s2 = inlined_call_operand.vmem [shape: f32[1,32], index: 2, kind: input, shape index: {}]
  %s3 = inlined_call_operand.vmem [shape: f32[1,32], index: 3, kind: input, shape index: {}]
  %s4 = inlined_call_operand.vmem [shape: bf16[288,32], index: 4, kind: input, shape index: {}]
  %s5 = inlined_call_operand.vmem [shape: f32[1,32], index: 5, kind: input, shape index: {}]
  %s6 = inlined_call_operand.vmem [shape: f32[1,32], index: 6, kind: input, shape index: {}]
  %s7 = inlined_call_operand.vmem [shape: bf16[32,128], index: 7, kind: input, shape index: {}]
  %s8 = inlined_call_operand.vmem [shape: f32[1,128], index: 8, kind: input, shape index: {}]
  %s9 = inlined_call_operand.vmem [shape: f32[1,128], index: 9, kind: input, shape index: {}]
  %s10 = inlined_call_operand.hbm [shape: f32[2,8,8,128], index: 10, kind: output, shape index: {}]
  %s11 = sld [smem:[#allocation0]]
  $region73: #{bottleneck_pallas.1} parent=0
    _
  %s13 = ssub.s32 1, %s11
  %s14 = scalar_select 0, %s13, %s11
  $region1: #{bottleneck_pallas.1} parent=0
    #allocation2 [shape = 'u8[65536]{0}', space=vmem, size = 0x10000, scoped, tag = 'output window, operand 0']
    #allocation3 [shape = 's32[2]{0}', space=sflag, size = 0x8, scoped, tag = 'scoped memory for bottleneck_pallas.1']
    %15 = vsyncpa [#allocation3], 0
    %s16 = scalar_lea.sflag [#allocation3], 1
    %17 = vsyncpa %s16, 0
    loop: start=0, step=1, limit=4
    $region2: #{bottleneck_pallas.1} parent=1 // loop_pre_header
      _
    $region3: #{bottleneck_pallas.1} parent=1 // loop_header
      %s19 = sphi 0, %s23
      %p20 = scmp.ge.s32.totalorder %s19, 4
      %s29 = sphi 0, %s31
      %s32 = sphi 0, %s29
      %s33 = sphi 0, %s32
      %s49 = sphi 0, %s33
      %s53 = sphi 0, %s53
      %s55 = sphi 0, %s53
      %s56 = sphi 0, %s55
      %s70 = sphi 0, %s56
      %s74 = sphi 0, %s74
      %s76 = sphi 0, %s74
      %s77 = sphi 0, %s76
      %s91 = sphi 0, %s77
      %s95 = sphi 0, %s95
      %s97 = sphi 0, %s95
      %s98 = sphi 0, %s97
      %s112 = sphi 0, %s98
      %s116 = sphi 0, %s116
      %s118 = sphi 0, %s116
      %s119 = sphi 0, %s118
      %s133 = sphi 0, %s119
      %s137 = sphi 0, %s137
      %s139 = sphi 0, %s137
      %s140 = sphi 0, %s139
      %s154 = sphi 0, %s140
      %s158 = sphi 0, %s158
      %s160 = sphi 0, %s158
      %s161 = sphi 0, %s160
      %s175 = sphi 0, %s161
      %s179 = sphi 0, %s179
      %s181 = sphi 0, %s179
      %s182 = sphi 0, %s181
      %s196 = sphi 0, %s182
      %s200 = sphi 0, %s200
      %s202 = sphi 0, %s200
      %s203 = sphi 0, %s202
      %s217 = sphi 0, %s203
      %s221 = sphi 0, %s221
      %s223 = sphi 0, %s221
      %s224 = sphi 0, %s223
      %s238 = sphi 0, %s224
      %s244 = sphi 0, %s246
      %s247 = sphi 0, %s244
      %s248 = sphi 0, %s247
      %s264 = sphi 0, %s248
    $region4: #{bottleneck_pallas.1} parent=1 // loop_header_branch
      %22 = sbr.rel (%p20) target = $region8
    $region5: #{bottleneck_pallas.1} parent=1 // loop_body
      %s24 = ssub.s32 %s19, 1
      %s25 = ssub.s32 %s19, 2
      %s26 = sadd.s32 %s19, 1
      %s27 = ssub.s32 %s19, %s26
      %p28 = scmp.eq.s32.totalorder %s27, 0
      %s30 = sadd.s32 %s29, 1
      %s31 = scalar_select %p28, %s29, %s30
      %p34 = pneg %p28
      %p35 = scmp.eq.s32.totalorder %s19, 1
      %p36 = por %p34, %p35
      %p37 = scmp.ne.s32.totalorder %s29, %s32
      %p38 = scmp.eq.s32.totalorder %s19, 0
      %p39 = por %p37, %p38
      %p40 = scmp.ne.s32.totalorder %s29, %s32
      %p41 = scmp.eq.s32.totalorder %s24, 1
      %p42 = por %p40, %p41
      %p43 = scmp.ne.s32.totalorder %s32, %s33
      %p44 = scmp.eq.s32.totalorder %s24, 0
      %p45 = por %p43, %p44
      %p46 = scmp.ne.s32.totalorder %s32, %s33
      %p47 = scmp.eq.s32.totalorder %s25, 1
      %p48 = por %p46, %p47
      %p50 = scmp.ne.s32.totalorder %s33, %s49
      %p51 = scmp.eq.s32.totalorder %s25, 0
      %p52 = por %p50, %p51
      %s54 = sadd.s32 %s53, 1
      %p57 = scmp.eq.s32.totalorder %s19, 1
      %p58 = scmp.ne.s32.totalorder %s53, %s55
      %p59 = scmp.eq.s32.totalorder %s19, 0
      %p60 = por %p58, %p59
      %p61 = scmp.ne.s32.totalorder %s53, %s55
      %p62 = scmp.eq.s32.totalorder %s24, 1
      %p63 = por %p61, %p62
      %p64 = scmp.ne.s32.totalorder %s55, %s56
      %p65 = scmp.eq.s32.totalorder %s24, 0
      %p66 = por %p64, %p65
      %p67 = scmp.ne.s32.totalorder %s55, %s56
      %p68 = scmp.eq.s32.totalorder %s25, 1
      %p69 = por %p67, %p68
      %p71 = scmp.ne.s32.totalorder %s56, %s70
      %p72 = scmp.eq.s32.totalorder %s25, 0
      %p73 = por %p71, %p72
      %s75 = sadd.s32 %s74, 1
      %p78 = scmp.eq.s32.totalorder %s19, 1
      %p79 = scmp.ne.s32.totalorder %s74, %s76
      %p80 = scmp.eq.s32.totalorder %s19, 0
      %p81 = por %p79, %p80
      %p82 = scmp.ne.s32.totalorder %s74, %s76
      %p83 = scmp.eq.s32.totalorder %s24, 1
      %p84 = por %p82, %p83
      %p85 = scmp.ne.s32.totalorder %s76, %s77
      %p86 = scmp.eq.s32.totalorder %s24, 0
      %p87 = por %p85, %p86
      %p88 = scmp.ne.s32.totalorder %s76, %s77
      %p89 = scmp.eq.s32.totalorder %s25, 1
      %p90 = por %p88, %p89
      %p92 = scmp.ne.s32.totalorder %s77, %s91
      %p93 = scmp.eq.s32.totalorder %s25, 0
      %p94 = por %p92, %p93
      %s96 = sadd.s32 %s95, 1
      %p99 = scmp.eq.s32.totalorder %s19, 1
      %p100 = scmp.ne.s32.totalorder %s95, %s97
      %p101 = scmp.eq.s32.totalorder %s19, 0
      %p102 = por %p100, %p101
      %p103 = scmp.ne.s32.totalorder %s95, %s97
      %p104 = scmp.eq.s32.totalorder %s24, 1
      %p105 = por %p103, %p104
      %p106 = scmp.ne.s32.totalorder %s97, %s98
      %p107 = scmp.eq.s32.totalorder %s24, 0
      %p108 = por %p106, %p107
      %p109 = scmp.ne.s32.totalorder %s97, %s98
      %p110 = scmp.eq.s32.totalorder %s25, 1
      %p111 = por %p109, %p110
      %p113 = scmp.ne.s32.totalorder %s98, %s112
      %p114 = scmp.eq.s32.totalorder %s25, 0
      %p115 = por %p113, %p114
      %s117 = sadd.s32 %s116, 1
      %p120 = scmp.eq.s32.totalorder %s19, 1
      %p121 = scmp.ne.s32.totalorder %s116, %s118
      %p122 = scmp.eq.s32.totalorder %s19, 0
      %p123 = por %p121, %p122
      %p124 = scmp.ne.s32.totalorder %s116, %s118
      %p125 = scmp.eq.s32.totalorder %s24, 1
      %p126 = por %p124, %p125
      %p127 = scmp.ne.s32.totalorder %s118, %s119
      %p128 = scmp.eq.s32.totalorder %s24, 0
      %p129 = por %p127, %p128
      %p130 = scmp.ne.s32.totalorder %s118, %s119
      %p131 = scmp.eq.s32.totalorder %s25, 1
      %p132 = por %p130, %p131
      %p134 = scmp.ne.s32.totalorder %s119, %s133
      %p135 = scmp.eq.s32.totalorder %s25, 0
      %p136 = por %p134, %p135
      %s138 = sadd.s32 %s137, 1
      %p141 = scmp.eq.s32.totalorder %s19, 1
      %p142 = scmp.ne.s32.totalorder %s137, %s139
      %p143 = scmp.eq.s32.totalorder %s19, 0
      %p144 = por %p142, %p143
      %p145 = scmp.ne.s32.totalorder %s137, %s139
      %p146 = scmp.eq.s32.totalorder %s24, 1
      %p147 = por %p145, %p146
      %p148 = scmp.ne.s32.totalorder %s139, %s140
      %p149 = scmp.eq.s32.totalorder %s24, 0
      %p150 = por %p148, %p149
      %p151 = scmp.ne.s32.totalorder %s139, %s140
      %p152 = scmp.eq.s32.totalorder %s25, 1
      %p153 = por %p151, %p152
      %p155 = scmp.ne.s32.totalorder %s140, %s154
      %p156 = scmp.eq.s32.totalorder %s25, 0
      %p157 = por %p155, %p156
      %s159 = sadd.s32 %s158, 1
      %p162 = scmp.eq.s32.totalorder %s19, 1
      %p163 = scmp.ne.s32.totalorder %s158, %s160
      %p164 = scmp.eq.s32.totalorder %s19, 0
      %p165 = por %p163, %p164
      %p166 = scmp.ne.s32.totalorder %s158, %s160
      %p167 = scmp.eq.s32.totalorder %s24, 1
      %p168 = por %p166, %p167
      %p169 = scmp.ne.s32.totalorder %s160, %s161
      %p170 = scmp.eq.s32.totalorder %s24, 0
      %p171 = por %p169, %p170
      %p172 = scmp.ne.s32.totalorder %s160, %s161
      %p173 = scmp.eq.s32.totalorder %s25, 1
      %p174 = por %p172, %p173
      %p176 = scmp.ne.s32.totalorder %s161, %s175
      %p177 = scmp.eq.s32.totalorder %s25, 0
      %p178 = por %p176, %p177
      %s180 = sadd.s32 %s179, 1
      %p183 = scmp.eq.s32.totalorder %s19, 1
      %p184 = scmp.ne.s32.totalorder %s179, %s181
      %p185 = scmp.eq.s32.totalorder %s19, 0
      %p186 = por %p184, %p185
      %p187 = scmp.ne.s32.totalorder %s179, %s181
      %p188 = scmp.eq.s32.totalorder %s24, 1
      %p189 = por %p187, %p188
      %p190 = scmp.ne.s32.totalorder %s181, %s182
      %p191 = scmp.eq.s32.totalorder %s24, 0
      %p192 = por %p190, %p191
      %p193 = scmp.ne.s32.totalorder %s181, %s182
      %p194 = scmp.eq.s32.totalorder %s25, 1
      %p195 = por %p193, %p194
      %p197 = scmp.ne.s32.totalorder %s182, %s196
      %p198 = scmp.eq.s32.totalorder %s25, 0
      %p199 = por %p197, %p198
      %s201 = sadd.s32 %s200, 1
      %p204 = scmp.eq.s32.totalorder %s19, 1
      %p205 = scmp.ne.s32.totalorder %s200, %s202
      %p206 = scmp.eq.s32.totalorder %s19, 0
      %p207 = por %p205, %p206
      %p208 = scmp.ne.s32.totalorder %s200, %s202
      %p209 = scmp.eq.s32.totalorder %s24, 1
      %p210 = por %p208, %p209
      %p211 = scmp.ne.s32.totalorder %s202, %s203
      %p212 = scmp.eq.s32.totalorder %s24, 0
      %p213 = por %p211, %p212
      %p214 = scmp.ne.s32.totalorder %s202, %s203
      %p215 = scmp.eq.s32.totalorder %s25, 1
      %p216 = por %p214, %p215
      %p218 = scmp.ne.s32.totalorder %s203, %s217
      %p219 = scmp.eq.s32.totalorder %s25, 0
      %p220 = por %p218, %p219
      %s222 = sadd.s32 %s221, 1
      %p225 = scmp.eq.s32.totalorder %s19, 1
      %p226 = scmp.ne.s32.totalorder %s221, %s223
      %p227 = scmp.eq.s32.totalorder %s19, 0
      %p228 = por %p226, %p227
      %p229 = scmp.ne.s32.totalorder %s221, %s223
      %p230 = scmp.eq.s32.totalorder %s24, 1
      %p231 = por %p229, %p230
      %p232 = scmp.ne.s32.totalorder %s223, %s224
      %p233 = scmp.eq.s32.totalorder %s24, 0
      %p234 = por %p232, %p233
      %p235 = scmp.ne.s32.totalorder %s223, %s224
      %p236 = scmp.eq.s32.totalorder %s25, 1
      %p237 = por %p235, %p236
      %p239 = scmp.ne.s32.totalorder %s224, %s238
      %p240 = scmp.eq.s32.totalorder %s25, 0
      %p241 = por %p239, %p240
      %s242 = ssub.s32 %s19, %s26
      %p243 = scmp.eq.s32.totalorder %s242, 0
      %s245 = sadd.s32 %s244, 1
      %s246 = scalar_select %p243, %s244, %s245
      %p249 = pneg %p243
      %p250 = scmp.eq.s32.totalorder %s19, 1
      %p251 = por %p249, %p250
      %p252 = scmp.ne.s32.totalorder %s244, %s247
      %p253 = scmp.eq.s32.totalorder %s19, 0
      %p254 = por %p252, %p253
      %p255 = scmp.ne.s32.totalorder %s244, %s247
      %p256 = scmp.eq.s32.totalorder %s24, 1
      %p257 = por %p255, %p256
      %p258 = scmp.ne.s32.totalorder %s247, %s248
      %p259 = scmp.eq.s32.totalorder %s24, 0
      %p260 = por %p258, %p259
      %p261 = scmp.ne.s32.totalorder %s247, %s248
      %p262 = scmp.eq.s32.totalorder %s25, 1
      %p263 = por %p261, %p262
      %p265 = scmp.ne.s32.totalorder %s248, %s264
      %p266 = scmp.eq.s32.totalorder %s25, 0
      %p267 = por %p265, %p266
      %p268 = scmp.le.s32.totalorder 1, %s19
      %p269 = scmp.lt.s32.totalorder %s19, 3
      %p270 = pnand %p268, %p269
      %p271 = pneg %p270
      // Predicated region
      $region9: #{bottleneck_pallas.1} parent=5 // pred_check
        _
      $region10: #{bottleneck_pallas.1} parent=5 // pred_check_branch
        %273 = sbr.rel (%p270) target = $region12
      $region11: #{bottleneck_pallas.1} parent=5 // pred_region
        %s274 = ssub.s32 %s19, 1
        // Predicated region
        $region13: #{bottleneck_pallas.1} parent=11 // pred_check
          %p275 = pneg %p66
        $region14: #{bottleneck_pallas.1} parent=11 // pred_check_branch
          %277 = sbr.rel (%p275) target = $region16
        $region15: #{bottleneck_pallas.1} parent=11 // pred_region
          _
        $region16: #{bottleneck_pallas.1} parent=11 // pred_fallthru
          _
        // Predicated region
        $region17: #{bottleneck_pallas.1} parent=11 // pred_check
          %p278 = pneg %p87
        $region18: #{bottleneck_pallas.1} parent=11 // pred_check_branch
          %280 = sbr.rel (%p278) target = $region20
        $region19: #{bottleneck_pallas.1} parent=11 // pred_region
          _
        $region20: #{bottleneck_pallas.1} parent=11 // pred_fallthru
          _
        // Predicated region
        $region21: #{bottleneck_pallas.1} parent=11 // pred_check
          %p281 = pneg %p108
        $region22: #{bottleneck_pallas.1} parent=11 // pred_check_branch
          %283 = sbr.rel (%p281) target = $region24
        $region23: #{bottleneck_pallas.1} parent=11 // pred_region
          _
        $region24: #{bottleneck_pallas.1} parent=11 // pred_fallthru
          _
        // Predicated region
        $region25: #{bottleneck_pallas.1} parent=11 // pred_check
          %p284 = pneg %p129
        $region26: #{bottleneck_pallas.1} parent=11 // pred_check_branch
          %286 = sbr.rel (%p284) target = $region28
        $region27: #{bottleneck_pallas.1} parent=11 // pred_region
          _
        $region28: #{bottleneck_pallas.1} parent=11 // pred_fallthru
          _
        // Predicated region
        $region29: #{bottleneck_pallas.1} parent=11 // pred_check
          %p287 = pneg %p150
        $region30: #{bottleneck_pallas.1} parent=11 // pred_check_branch
          %289 = sbr.rel (%p287) target = $region32
        $region31: #{bottleneck_pallas.1} parent=11 // pred_region
          _
        $region32: #{bottleneck_pallas.1} parent=11 // pred_fallthru
          _
        // Predicated region
        $region33: #{bottleneck_pallas.1} parent=11 // pred_check
          %p290 = pneg %p171
        $region34: #{bottleneck_pallas.1} parent=11 // pred_check_branch
          %292 = sbr.rel (%p290) target = $region36
        $region35: #{bottleneck_pallas.1} parent=11 // pred_region
          _
        $region36: #{bottleneck_pallas.1} parent=11 // pred_fallthru
          _
        // Predicated region
        $region37: #{bottleneck_pallas.1} parent=11 // pred_check
          %p293 = pneg %p192
        $region38: #{bottleneck_pallas.1} parent=11 // pred_check_branch
          %295 = sbr.rel (%p293) target = $region40
        $region39: #{bottleneck_pallas.1} parent=11 // pred_region
          _
        $region40: #{bottleneck_pallas.1} parent=11 // pred_fallthru
          _
        // Predicated region
        $region41: #{bottleneck_pallas.1} parent=11 // pred_check
          %p296 = pneg %p213
        $region42: #{bottleneck_pallas.1} parent=11 // pred_check_branch
          %298 = sbr.rel (%p296) target = $region44
        $region43: #{bottleneck_pallas.1} parent=11 // pred_region
          _
        $region44: #{bottleneck_pallas.1} parent=11 // pred_fallthru
          _
        // Predicated region
        $region45: #{bottleneck_pallas.1} parent=11 // pred_check
          %p299 = pneg %p234
        $region46: #{bottleneck_pallas.1} parent=11 // pred_check_branch
          %301 = sbr.rel (%p299) target = $region48
        $region47: #{bottleneck_pallas.1} parent=11 // pred_region
          _
        $region48: #{bottleneck_pallas.1} parent=11 // pred_fallthru
          _
      $region12: #{bottleneck_pallas.1} parent=5 // pred_fallthru
        _
      %p302 = scmp.lt.s32.totalorder %s19, 2
      // Predicated region
      $region49: #{bottleneck_pallas.1} parent=5 // pred_check
        %p303 = pneg %p302
      $region50: #{bottleneck_pallas.1} parent=5 // pred_check_branch
        %305 = sbr.rel (%p303) target = $region52
      $region51: #{bottleneck_pallas.1} parent=5 // pred_region
        // Predicated region
        $region53: #{bottleneck_pallas.1} parent=51 // pred_check
          %p306 = pneg %p39
        $region54: #{bottleneck_pallas.1} parent=51 // pred_check_branch
          %308 = sbr.rel (%p306) target = $region56
        $region55: #{bottleneck_pallas.1} parent=51 // pred_region
          %p309 = scmp.lt.s32.totalorder %s19, 1
          %s310 = scalar_select %p309, %s19, 1
          %s311 = smul.addr %s310, 8
          %s312 = smul.addr %s311, 8
          %s313 = scalar_lea.vmem %s0, %s312
        $region56: #{bottleneck_pallas.1} parent=51 // pred_fallthru
          _
      $region52: #{bottleneck_pallas.1} parent=5 // pred_fallthru
        _
      %p314 = scmp.le.s32.totalorder 1, %s19
      %p315 = scmp.lt.s32.totalorder %s19, 3
      %p316 = pnand %p314, %p315
      %p317 = pneg %p316
      // Predicated region
      $region57: #{bottleneck_pallas.1} parent=5 // pred_check
        _
      $region58: #{bottleneck_pallas.1} parent=5 // pred_check_branch
        %319 = sbr.rel (%p316) target = $region60
      $region59: #{bottleneck_pallas.1} parent=5 // pred_region
        %s320 = ssub.s32 %s19, 1
        %p321 = scmp.lt.s32.totalorder %s24, 1
        %s322 = scalar_select %p321, %s24, 1
        %s323 = smul.addr %s322, 8
        %s324 = smul.addr %s323, 8
        %s325 = scalar_lea.vmem %s0, %s324
        %p326 = pneg %p45
        %p327 = pneg %p42
        %p328 = pneg %p66
        %p329 = pneg %p63
        %p330 = pneg %p87
        %p331 = pneg %p84
        %p332 = pneg %p108
        %p333 = pneg %p105
        %p334 = pneg %p129
        %p335 = pneg %p126
        %p336 = pneg %p150
        %p337 = pneg %p147
        %p338 = pneg %p171
        %p339 = pneg %p168
        %p340 = pneg %p192
        %p341 = pneg %p189
        %p342 = pneg %p213
        %p343 = pneg %p210
        %p344 = pneg %p234
        %p345 = pneg %p231
        %p346 = pneg %p260
        %p347 = pneg %p257
        %s348 = sand.u32 %s247, 1
        %s349 = scalar_lea.sflag [#allocation3], %s348
        %s350 = sand.u32 %s247, 1
        %s351 = smul.addr %s350, 64
        %s352 = scalar_lea.vmem [#allocation2], %s351
        %p353 = scmp.lt.s32.totalorder %s24, 1
        %s354 = scalar_select %p353, %s24, 1
        %s355 = smul.addr %s354, 8
        %s356 = smul.addr %s355, 8
        %s357 = scalar_lea.vmem %s0, %s356
        %v359 = vld [vmem:[%s357] sm:$0xff]
        %v360 = vld [vmem:[%s357 + $0x8] sm:$0xff]
        %v361 = vld [vmem:[%s357 + $0x10] sm:$0xff]
        %v362 = vld [vmem:[%s357 + $0x18] sm:$0xff]
        %v363 = vld [vmem:[%s357 + $0x20] sm:$0xff]
        %v364 = vld [vmem:[%s357 + $0x28] sm:$0xff]
        %v365 = vld [vmem:[%s357 + $0x30] sm:$0xff]
        %v366 = vld [vmem:[%s357 + $0x38] sm:$0xff]
        %v367 = vpack.c.bf16 %v360, %v359
        %v368 = vpack.c.bf16 %v362, %v361
        %v369 = vpack.c.bf16 %v364, %v363
        %v370 = vpack.c.bf16 %v366, %v365
        %v371 = vld [vmem:[%s1] sm:$0xf]
        %v372 = vld [vmem:[%s1 + $0x4] sm:$0xf]
        %v373 = vld [vmem:[%s1 + $0x8] sm:$0xf]
        %v374 = vld [vmem:[%s1 + $0xc] sm:$0xf]
        %v375 = vld [vmem:[%s1 + $0x10] sm:$0xf]
        %v376 = vld [vmem:[%s1 + $0x14] sm:$0xf]
        %v377 = vld [vmem:[%s1 + $0x18] sm:$0xf]
        %v378 = vld [vmem:[%s1 + $0x1c] sm:$0xf]
        %v379 = vld [vmem:[%s1 + $0x20] sm:$0xf]
        %v380 = vld [vmem:[%s1 + $0x24] sm:$0xf]
        %v381 = vld [vmem:[%s1 + $0x28] sm:$0xf]
        %v382 = vld [vmem:[%s1 + $0x2c] sm:$0xf]
        %v383 = vld [vmem:[%s1 + $0x30] sm:$0xf]
        %v384 = vld [vmem:[%s1 + $0x34] sm:$0xf]
        %v385 = vld [vmem:[%s1 + $0x38] sm:$0xf]
        %v386 = vld [vmem:[%s1 + $0x3c] sm:$0xf]
        %v403 = vunpack.c.l.b16 %v371
        %v404 = vunpack.c.l.b16 %v372
        %v405 = vunpack.c.l.b16 %v373
        %v406 = vunpack.c.l.b16 %v374
        %v407 = vunpack.c.l.b16 %v375
        %v408 = vunpack.c.l.b16 %v376
        %v409 = vunpack.c.l.b16 %v377
        %v410 = vunpack.c.l.b16 %v378
        %v411 = vunpack.c.l.b16 %v379
        %v412 = vunpack.c.l.b16 %v380
        %v413 = vunpack.c.l.b16 %v381
        %v414 = vunpack.c.l.b16 %v382
        %v415 = vunpack.c.l.b16 %v383
        %v416 = vunpack.c.l.b16 %v384
        %v417 = vunpack.c.l.b16 %v385
        %v418 = vunpack.c.l.b16 %v386
        %v419 = vpack.c.b16 %v404, %v403
        %v420 = vpack.c.b16 %v406, %v405
        %v421 = vpack.c.b16 %v408, %v407
        %v422 = vpack.c.b16 %v410, %v409
        %v423 = vpack.c.b16 %v412, %v411
        %v424 = vpack.c.b16 %v414, %v413
        %v425 = vpack.c.b16 %v416, %v415
        %v426 = vpack.c.b16 %v418, %v417
        %435 = vmatprep.subr.bf16.mxu0 0
        %436 = vmatpush1.bf16.msra.mxu0 %v419
        %437 = vmatprep.subr.bf16.mxu0 0
        %438 = vmatpush1.bf16.msra.mxu0 %v420
        %439 = vmatprep.subr.bf16.mxu0 0
        %440 = vmatpush1.bf16.msra.mxu0 %v421
        %441 = vmatprep.subr.bf16.mxu0 0
        %442 = vmatpush1.bf16.msra.mxu0 %v422
        %443 = vmatprep.subr.bf16.mxu0 0
        %444 = vmatpush1.bf16.msra.mxu0 %v423
        %445 = vmatprep.subr.bf16.mxu0 0
        %446 = vmatpush1.bf16.msra.mxu0 %v424
        %447 = vmatprep.subr.bf16.mxu0 0
        %448 = vmatpush1.bf16.msra.mxu0 %v425
        %449 = vmatprep.subr.bf16.mxu0 0
        %450 = vmatpush1.bf16.msra.mxu0 %v426
        %451 = vmatprep.subr.bf16.mxu0 0
        %452 = vmatpush1.bf16.msra.mxu0 0
        %453 = vmatprep.subr.bf16.mxu0 0
        %454 = vmatpush1.bf16.msra.mxu0 0
        %455 = vmatprep.subr.bf16.mxu0 0
        %456 = vmatpush1.bf16.msra.mxu0 0
        %457 = vmatprep.subr.bf16.mxu0 0
        %458 = vmatpush1.bf16.msra.mxu0 0
        %459 = vmatprep.subr.bf16.mxu0 0
        %460 = vmatpush1.bf16.msra.mxu0 0
        %461 = vmatprep.subr.bf16.mxu0 0
        %462 = vmatpush1.bf16.msra.mxu0 0
        %463 = vmatprep.subr.bf16.mxu0 0
        %464 = vmatpush1.bf16.msra.mxu0 0
        %465 = vmatprep.subr.bf16.mxu0 0
        %466 = vmatpush1.bf16.msra.mxu0 0
        %467 = vmatprep.mubr.bf16.mxu0 0
        %468 = vmatmul.mubr.bf16.gmra.mrb[0].mxu0 %v367
        %v469 = vpop.f32.mrb[0].mxu0
        %v470 = vadd.f32 0.0, %v469
        %v471 = vpop.f32.mrb[0].mxu0
        %v472 = vpop.f32.mrb[0].mxu0
        %v473 = vadd.f32 0.0, %v472
        %v474 = vpop.f32.mrb[0].mxu0
        %475 = vmatprep.mubr.bf16.mxu0 0
        %476 = vmatmul.mubr.bf16.gmra.mrb[0].mxu0 %v368
        %v477 = vpop.f32.mrb[0].mxu0
        %v478 = vadd.f32 0.0, %v477
        %v479 = vpop.f32.mrb[0].mxu0
        %v480 = vpop.f32.mrb[0].mxu0
        %v481 = vadd.f32 0.0, %v480
        %v482 = vpop.f32.mrb[0].mxu0
        %483 = vmatprep.mubr.bf16.mxu0 0
        %484 = vmatmul.mubr.bf16.gmra.mrb[0].mxu0 %v369
        %v485 = vpop.f32.mrb[0].mxu0
        %v486 = vadd.f32 0.0, %v485
        %v487 = vpop.f32.mrb[0].mxu0
        %v488 = vpop.f32.mrb[0].mxu0
        %v489 = vadd.f32 0.0, %v488
        %v490 = vpop.f32.mrb[0].mxu0
        %491 = vmatprep.mubr.bf16.mxu0 0
        %492 = vmatmul.mubr.bf16.gmra.mrb[0].mxu0 %v370
        %v493 = vpop.f32.mrb[0].mxu0
        %v494 = vadd.f32 0.0, %v493
        %v495 = vpop.f32.mrb[0].mxu0
        %v496 = vpop.f32.mrb[0].mxu0
        %v497 = vadd.f32 0.0, %v496
        %v498 = vpop.f32.mrb[0].mxu0
        %499 = vdwg.mxu0
        %v500 = vld [vmem:[%s2] sm:$0x1]
        %v502 = vlaneseq
        %v503 = vshrl.u32 %v502, 7
        %v504 = vsub.s32 0, %v503
        %v505 = vrot.slane %v500, %v504
        %v507 = vmul.f32 %v470, %v505
        %v508 = vmul.f32 %v473, %v505
        %v509 = vmul.f32 %v478, %v505
        %v510 = vmul.f32 %v481, %v505
        %v511 = vmul.f32 %v486, %v505
        %v512 = vmul.f32 %v489, %v505
        %v513 = vmul.f32 %v494, %v505
        %v514 = vmul.f32 %v497, %v505
        %v515 = vld [vmem:[%s3] sm:$0x1]
        %v517 = vlaneseq
        %v518 = vshrl.u32 %v517, 7
        %v519 = vsub.s32 0, %v518
        %v520 = vrot.slane %v515, %v519
        %v522 = vadd.f32 %v507, %v520
        %v523 = vadd.f32 %v508, %v520
        %v524 = vadd.f32 %v509, %v520
        %v525 = vadd.f32 %v510, %v520
        %v526 = vadd.f32 %v511, %v520
        %v527 = vadd.f32 %v512, %v520
        %v528 = vadd.f32 %v513, %v520
        %v529 = vadd.f32 %v514, %v520
        %v530 = vmax.f32 %v522, 0.0
        %v531 = vmax.f32 %v523, 0.0
        %v532 = vmax.f32 %v524, 0.0
        %v533 = vmax.f32 %v525, 0.0
        %v534 = vmax.f32 %v526, 0.0
        %v535 = vmax.f32 %v527, 0.0
        %v536 = vmax.f32 %v528, 0.0
        %v537 = vmax.f32 %v529, 0.0
        %v547 = vrot.slane 0.0, 7
        %v548 = vrot.slane %v530, 7
        %v549 = vrot.slane %v531, 7
        %v550 = vrot.slane %v532, 7
        %v551 = vrot.slane %v533, 7
        %v552 = vrot.slane %v534, 7
        %v553 = vrot.slane %v535, 7
        %v554 = vrot.slane %v536, 7
        %v555 = vrot.slane %v537, 7
        %vm565 = vcmask 1040384
        %v566 = vsel %vm565, 0.0, %v547
        %v567 = vsel %vm565, 0.0, %v548
        %v568 = vsel %vm565, 0.0, %v549
        %v569 = vsel %vm565, 0.0, %v550
        %v570 = vsel %vm565, 0.0, %v551
        %v571 = vsel %vm565, 0.0, %v552
        %v572 = vsel %vm565, 0.0, %v553
        %v573 = vsel %vm565, 0.0, %v554
        %v574 = vsel %vm565, 0.0, %v555
        %v575 = vsel %vm565, %v547, 0.0
        %v576 = vsel %vm565, %v548, 0.0
        %v577 = vsel %vm565, %v549, 0.0
        %v578 = vsel %vm565, %v550, 0.0
        %v579 = vsel %vm565, %v551, 0.0
        %v580 = vsel %vm565, %v552, 0.0
        %v581 = vsel %vm565, %v553, 0.0
        %v582 = vsel %vm565, %v554, 0.0
        %v583 = vsel %vm565, %v555, 0.0
        %vm600 = vcmask 1046528
        %v601 = vrot.slane %v566, 1
        %v602 = vrot.slane %v575, 1
        %v603 = vsel %vm600, %v601, %v602
        %v604 = vrot.slane %v567, 1
        %v605 = vrot.slane %v576, 1
        %v606 = vsel %vm600, %v604, %v605
        %v607 = vrot.slane %v568, 1
        %v608 = vrot.slane %v577, 1
        %v609 = vsel %vm600, %v607, %v608
        %v610 = vrot.slane %v569, 1
        %v611 = vrot.slane %v578, 1
        %v612 = vsel %vm600, %v610, %v611
        %v613 = vrot.slane %v570, 1
        %v614 = vrot.slane %v579, 1
        %v615 = vsel %vm600, %v613, %v614
        %v616 = vrot.slane %v571, 1
        %v617 = vrot.slane %v580, 1
        %v618 = vsel %vm600, %v616, %v617
        %v619 = vrot.slane %v572, 1
        %v620 = vrot.slane %v581, 1
        %v621 = vsel %vm600, %v619, %v620
        %v622 = vrot.slane %v573, 1
        %v623 = vrot.slane %v582, 1
        %v624 = vsel %vm600, %v622, %v623
        %vm625 = vcmask 1045504
        %v626 = vrot.slane %v566, 2
        %v627 = vrot.slane %v575, 2
        %v628 = vsel %vm625, %v626, %v627
        %v629 = vrot.slane %v567, 2
        %v630 = vrot.slane %v576, 2
        %v631 = vsel %vm625, %v629, %v630
        %v632 = vrot.slane %v568, 2
        %v633 = vrot.slane %v577, 2
        %v634 = vsel %vm625, %v632, %v633
        %v635 = vrot.slane %v569, 2
        %v636 = vrot.slane %v578, 2
        %v637 = vsel %vm625, %v635, %v636
        %v638 = vrot.slane %v570, 2
        %v639 = vrot.slane %v579, 2
        %v640 = vsel %vm625, %v638, %v639
        %v641 = vrot.slane %v571, 2
        %v642 = vrot.slane %v580, 2
        %v643 = vsel %vm625, %v641, %v642
        %v644 = vrot.slane %v572, 2
        %v645 = vrot.slane %v581, 2
        %v646 = vsel %vm625, %v644, %v645
        %v647 = vrot.slane %v573, 2
        %v648 = vrot.slane %v582, 2
        %v649 = vsel %vm625, %v647, %v648
        %v652 = vrot.slane %v574, 1
        %v653 = vrot.slane %v583, 1
        %v654 = vsel %vm600, %v652, %v653
        %v663 = vrot.slane %v574, 2
        %v664 = vrot.slane %v583, 2
        %v665 = vsel %vm625, %v663, %v664
        %674 = vrot.lane.b32.xlu0 %v603, 32
        %v675 = vpop.permute.xlu0 %674
        %676 = vrot.lane.b32.xlu0 %v606, 32
        %v677 = vpop.permute.xlu0 %676
        %678 = vrot.lane.b32.xlu0 %v609, 32
        %v679 = vpop.permute.xlu0 %678
        %680 = vrot.lane.b32.xlu0 %v612, 32
        %v681 = vpop.permute.xlu0 %680
        %682 = vrot.lane.b32.xlu0 %v615, 32
        %v683 = vpop.permute.xlu0 %682
        %684 = vrot.lane.b32.xlu0 %v618, 32
        %v685 = vpop.permute.xlu0 %684
        %686 = vrot.lane.b32.xlu0 %v621, 32
        %v687 = vpop.permute.xlu0 %686
        %688 = vrot.lane.b32.xlu0 %v624, 32
        %v689 = vpop.permute.xlu0 %688
        %698 = vrot.lane.b32.xlu0 %v628, 64
        %v699 = vpop.permute.xlu0 %698
        %700 = vrot.lane.b32.xlu0 %v631, 64
        %v701 = vpop.permute.xlu0 %700
        %702 = vrot.lane.b32.xlu0 %v634, 64
        %v703 = vpop.permute.xlu0 %702
        %704 = vrot.lane.b32.xlu0 %v637, 64
        %v705 = vpop.permute.xlu0 %704
        %706 = vrot.lane.b32.xlu0 %v640, 64
        %v707 = vpop.permute.xlu0 %706
        %708 = vrot.lane.b32.xlu0 %v643, 64
        %v709 = vpop.permute.xlu0 %708
        %710 = vrot.lane.b32.xlu0 %v646, 64
        %v711 = vpop.permute.xlu0 %710
        %712 = vrot.lane.b32.xlu0 %v649, 64
        %v713 = vpop.permute.xlu0 %712
        %722 = vrot.lane.b32.xlu0 %v567, 96
        %v723 = vpop.permute.xlu0 %722
        %724 = vrot.lane.b32.xlu0 %v568, 96
        %v725 = vpop.permute.xlu0 %724
        %726 = vrot.lane.b32.xlu0 %v569, 96
        %v727 = vpop.permute.xlu0 %726
        %728 = vrot.lane.b32.xlu0 %v570, 96
        %v729 = vpop.permute.xlu0 %728
        %730 = vrot.lane.b32.xlu0 %v571, 96
        %v731 = vpop.permute.xlu0 %730
        %732 = vrot.lane.b32.xlu0 %v572, 96
        %v733 = vpop.permute.xlu0 %732
        %734 = vrot.lane.b32.xlu0 %v573, 96
        %v735 = vpop.permute.xlu0 %734
        %736 = vrot.lane.b32.xlu0 %v574, 96
        %v737 = vpop.permute.xlu0 %736
        %746 = vrot.lane.b32.xlu0 %v631, 32
        %v747 = vpop.permute.xlu0 %746
        %748 = vrot.lane.b32.xlu0 %v634, 32
        %v749 = vpop.permute.xlu0 %748
        %750 = vrot.lane.b32.xlu0 %v637, 32
        %v751 = vpop.permute.xlu0 %750
        %752 = vrot.lane.b32.xlu0 %v640, 32
        %v753 = vpop.permute.xlu0 %752
        %754 = vrot.lane.b32.xlu0 %v643, 32
        %v755 = vpop.permute.xlu0 %754
        %756 = vrot.lane.b32.xlu0 %v646, 32
        %v757 = vpop.permute.xlu0 %756
        %758 = vrot.lane.b32.xlu0 %v649, 32
        %v759 = vpop.permute.xlu0 %758
        %760 = vrot.lane.b32.xlu0 %v665, 32
        %v761 = vpop.permute.xlu0 %760
        %770 = vrot.lane.b32.xlu0 %v568, 64
        %v771 = vpop.permute.xlu0 %770
        %772 = vrot.lane.b32.xlu0 %v569, 64
        %v773 = vpop.permute.xlu0 %772
        %774 = vrot.lane.b32.xlu0 %v570, 64
        %v775 = vpop.permute.xlu0 %774
        %776 = vrot.lane.b32.xlu0 %v571, 64
        %v777 = vpop.permute.xlu0 %776
        %778 = vrot.lane.b32.xlu0 %v572, 64
        %v779 = vpop.permute.xlu0 %778
        %780 = vrot.lane.b32.xlu0 %v573, 64
        %v781 = vpop.permute.xlu0 %780
        %782 = vrot.lane.b32.xlu0 %v574, 64
        %v783 = vpop.permute.xlu0 %782
        %784 = vrot.lane.b32.xlu0 %v566, 64
        %v785 = vpop.permute.xlu0 %784
        %794 = vrot.lane.b32.xlu0 %v609, 96
        %v795 = vpop.permute.xlu0 %794
        %796 = vrot.lane.b32.xlu0 %v612, 96
        %v797 = vpop.permute.xlu0 %796
        %798 = vrot.lane.b32.xlu0 %v615, 96
        %v799 = vpop.permute.xlu0 %798
        %800 = vrot.lane.b32.xlu0 %v618, 96
        %v801 = vpop.permute.xlu0 %800
        %802 = vrot.lane.b32.xlu0 %v621, 96
        %v803 = vpop.permute.xlu0 %802
        %804 = vrot.lane.b32.xlu0 %v624, 96
        %v805 = vpop.permute.xlu0 %804
        %806 = vrot.lane.b32.xlu0 %v654, 96
        %v807 = vpop.permute.xlu0 %806
        %808 = vrot.lane.b32.xlu0 %v603, 96
        %v809 = vpop.permute.xlu0 %808
        %vm818 = vcmask 261120
        %v819 = vsel %vm818, %v566, %v675
        %v820 = vsel %vm818, %v567, %v677
        %v821 = vsel %vm818, %v568, %v679
        %v822 = vsel %vm818, %v569, %v681
        %v823 = vsel %vm818, %v570, %v683
        %v824 = vsel %vm818, %v571, %v685
        %v825 = vsel %vm818, %v572, %v687
        %v826 = vsel %vm818, %v573, %v689
        %vm827 = vcmask 523264
        %v828 = vsel %vm827, %v819, %v699
        %v829 = vsel %vm827, %v820, %v701
        %v830 = vsel %vm827, %v821, %v703
        %v831 = vsel %vm827, %v822, %v705
        %v832 = vsel %vm827, %v823, %v707
        %v833 = vsel %vm827, %v824, %v709
        %v834 = vsel %vm827, %v825, %v711
        %v835 = vsel %vm827, %v826, %v713
        %vm836 = vcmask 785408
        %v837 = vsel %vm836, %v828, %v723
        %v838 = vsel %vm836, %v829, %v725
        %v839 = vsel %vm836, %v830, %v727
        %v840 = vsel %vm836, %v831, %v729
        %v841 = vsel %vm836, %v832, %v731
        %v842 = vsel %vm836, %v833, %v733
        %v843 = vsel %vm836, %v834, %v735
        %v844 = vsel %vm836, %v835, %v737
        %v845 = vsel %vm818, %v606, %v747
        %v846 = vsel %vm818, %v609, %v749
        %v847 = vsel %vm818, %v612, %v751
        %v848 = vsel %vm818, %v615, %v753
        %v849 = vsel %vm818, %v618, %v755
        %v850 = vsel %vm818, %v621, %v757
        %v851 = vsel %vm818, %v624, %v759
        %v852 = vsel %vm818, %v654, %v761
        %v853 = vsel %vm827, %v845, %v771
        %v854 = vsel %vm827, %v846, %v773
        %v855 = vsel %vm827, %v847, %v775
        %v856 = vsel %vm827, %v848, %v777
        %v857 = vsel %vm827, %v849, %v779
        %v858 = vsel %vm827, %v850, %v781
        %v859 = vsel %vm827, %v851, %v783
        %v860 = vsel %vm827, %v852, %v785
        %v861 = vsel %vm836, %v853, %v795
        %v862 = vsel %vm836, %v854, %v797
        %v863 = vsel %vm836, %v855, %v799
        %v864 = vsel %vm836, %v856, %v801
        %v865 = vsel %vm836, %v857, %v803
        %v866 = vsel %vm836, %v858, %v805
        %v867 = vsel %vm836, %v859, %v807
        %v868 = vsel %vm836, %v860, %v809
        %v869 = vpack.c.bf16 %v838, %v837
        %v870 = vpack.c.bf16 %v862, %v861
        %v871 = vpack.c.bf16 %v637, %v634
        %v872 = vpack.c.bf16 %v840, %v839
        %v873 = vpack.c.bf16 %v864, %v863
        %v874 = vpack.c.bf16 %v643, %v640
        %v875 = vpack.c.bf16 %v842, %v841
        %v876 = vpack.c.bf16 %v866, %v865
        %v877 = vpack.c.bf16 %v649, %v646
        %v878 = vpack.c.bf16 %v844, %v843
        %v879 = vpack.c.bf16 %v868, %v867
        %v880 = vpack.c.bf16 %v628, %v665
        %v881 = vld [vmem:[%s4] sm:$0xf]
        %v882 = vld [vmem:[%s4 + $0x4] sm:$0xf]
        %v883 = vld [vmem:[%s4 + $0x8] sm:$0xf]
        %v884 = vld [vmem:[%s4 + $0xc] sm:$0xf]
        %v885 = vld [vmem:[%s4 + $0x10] sm:$0xf]
        %v886 = vld [vmem:[%s4 + $0x14] sm:$0xf]
        %v887 = vld [vmem:[%s4 + $0x18] sm:$0xf]
        %v888 = vld [vmem:[%s4 + $0x1c] sm:$0xf]
        %v889 = vld [vmem:[%s4 + $0x20] sm:$0xf]
        %v890 = vld [vmem:[%s4 + $0x24] sm:$0xf]
        %v891 = vld [vmem:[%s4 + $0x28] sm:$0xf]
        %v892 = vld [vmem:[%s4 + $0x2c] sm:$0xf]
        %v893 = vld [vmem:[%s4 + $0x30] sm:$0xf]
        %v894 = vld [vmem:[%s4 + $0x34] sm:$0xf]
        %v895 = vld [vmem:[%s4 + $0x38] sm:$0xf]
        %v896 = vld [vmem:[%s4 + $0x3c] sm:$0xf]
        %v897 = vld [vmem:[%s4 + $0x40] sm:$0xf]
        %v898 = vld [vmem:[%s4 + $0x44] sm:$0xf]
        %v899 = vld [vmem:[%s4 + $0x48] sm:$0xf]
        %v900 = vld [vmem:[%s4 + $0x4c] sm:$0xf]
        %v901 = vld [vmem:[%s4 + $0x50] sm:$0xf]
        %v902 = vld [vmem:[%s4 + $0x54] sm:$0xf]
        %v903 = vld [vmem:[%s4 + $0x58] sm:$0xf]
        %v904 = vld [vmem:[%s4 + $0x5c] sm:$0xf]
        %v905 = vld [vmem:[%s4 + $0x60] sm:$0xf]
        %v906 = vld [vmem:[%s4 + $0x64] sm:$0xf]
        %v907 = vld [vmem:[%s4 + $0x68] sm:$0xf]
        %v908 = vld [vmem:[%s4 + $0x6c] sm:$0xf]
        %v909 = vld [vmem:[%s4 + $0x70] sm:$0xf]
        %v910 = vld [vmem:[%s4 + $0x74] sm:$0xf]
        %v911 = vld [vmem:[%s4 + $0x78] sm:$0xf]
        %v912 = vld [vmem:[%s4 + $0x7c] sm:$0xf]
        %v913 = vld [vmem:[%s4 + $0x80] sm:$0xf]
        %v914 = vld [vmem:[%s4 + $0x84] sm:$0xf]
        %v915 = vld [vmem:[%s4 + $0x88] sm:$0xf]
        %v916 = vld [vmem:[%s4 + $0x8c] sm:$0xf]
        %v953 = vunpack.c.l.b16 %v881
        %v954 = vunpack.c.l.b16 %v882
        %v955 = vunpack.c.l.b16 %v883
        %v956 = vunpack.c.l.b16 %v884
        %v957 = vunpack.c.l.b16 %v885
        %v958 = vunpack.c.l.b16 %v886
        %v959 = vunpack.c.l.b16 %v887
        %v960 = vunpack.c.l.b16 %v888
        %v961 = vunpack.c.l.b16 %v889
        %v962 = vunpack.c.l.b16 %v890
        %v963 = vunpack.c.l.b16 %v891
        %v964 = vunpack.c.l.b16 %v892
        %v965 = vunpack.c.l.b16 %v893
        %v966 = vunpack.c.l.b16 %v894
        %v967 = vunpack.c.l.b16 %v895
        %v968 = vunpack.c.l.b16 %v896
        %v969 = vunpack.c.l.b16 %v897
        %v970 = vunpack.c.l.b16 %v898
        %v971 = vunpack.c.l.b16 %v899
        %v972 = vunpack.c.l.b16 %v900
        %v973 = vunpack.c.l.b16 %v901
        %v974 = vunpack.c.l.b16 %v902
        %v975 = vunpack.c.l.b16 %v903
        %v976 = vunpack.c.l.b16 %v904
        %v977 = vunpack.c.l.b16 %v905
        %v978 = vunpack.c.l.b16 %v906
        %v979 = vunpack.c.l.b16 %v907
        %v980 = vunpack.c.l.b16 %v908
        %v981 = vunpack.c.l.b16 %v909
        %v982 = vunpack.c.l.b16 %v910
        %v983 = vunpack.c.l.b16 %v911
        %v984 = vunpack.c.l.b16 %v912
        %v985 = vunpack.c.l.b16 %v913
        %v986 = vunpack.c.l.b16 %v914
        %v987 = vunpack.c.l.b16 %v915
        %v988 = vunpack.c.l.b16 %v916
        %v989 = vpack.c.b16 %v954, %v953
        %v990 = vpack.c.b16 %v956, %v955
        %v991 = vpack.c.b16 %v958, %v957
        %v992 = vpack.c.b16 %v960, %v959
        %v993 = vpack.c.b16 %v962, %v961
        %v994 = vpack.c.b16 %v964, %v963
        %v995 = vpack.c.b16 %v966, %v965
        %v996 = vpack.c.b16 %v968, %v967
        %v997 = vpack.c.b16 %v970, %v969
        %v998 = vpack.c.b16 %v972, %v971
        %v999 = vpack.c.b16 %v974, %v973
        %v1000 = vpack.c.b16 %v976, %v975
        %v1001 = vpack.c.b16 %v978, %v977
        %v1002 = vpack.c.b16 %v980, %v979
        %v1003 = vpack.c.b16 %v982, %v981
        %v1004 = vpack.c.b16 %v984, %v983
        %v1005 = vpack.c.b16 %v986, %v985
        %v1006 = vpack.c.b16 %v988, %v987
        %v1026 = vsel %vm818, %v871, 0
        %v1029 = vsel %vm818, %v874, 0
        %v1032 = vsel %vm818, %v877, 0
        %v1035 = vsel %vm818, %v880, 0
        %1037 = vmatprep.subr.bf16.mxu0 0
        %1038 = vmatpush1.bf16.msra.mxu0 %v989
        %1039 = vmatprep.subr.bf16.mxu0 0
        %1040 = vmatpush1.bf16.msra.mxu0 %v990
        %1041 = vmatprep.subr.bf16.mxu0 0
        %1042 = vmatpush1.bf16.msra.mxu0 %v991
        %1043 = vmatprep.subr.bf16.mxu0 0
        %1044 = vmatpush1.bf16.msra.mxu0 %v992
        %1045 = vmatprep.subr.bf16.mxu0 0
        %1046 = vmatpush1.bf16.msra.mxu0 %v993
        %1047 = vmatprep.subr.bf16.mxu0 0
        %1048 = vmatpush1.bf16.msra.mxu0 %v994
        %1049 = vmatprep.subr.bf16.mxu0 0
        %1050 = vmatpush1.bf16.msra.mxu0 %v995
        %1051 = vmatprep.subr.bf16.mxu0 0
        %1052 = vmatpush1.bf16.msra.mxu0 %v996
        %1053 = vmatprep.subr.bf16.mxu0 0
        %1054 = vmatpush1.bf16.msra.mxu0 %v997
        %1055 = vmatprep.subr.bf16.mxu0 0
        %1056 = vmatpush1.bf16.msra.mxu0 %v998
        %1057 = vmatprep.subr.bf16.mxu0 0
        %1058 = vmatpush1.bf16.msra.mxu0 %v999
        %1059 = vmatprep.subr.bf16.mxu0 0
        %1060 = vmatpush1.bf16.msra.mxu0 %v1000
        %1061 = vmatprep.subr.bf16.mxu0 0
        %1062 = vmatpush1.bf16.msra.mxu0 %v1001
        %1063 = vmatprep.subr.bf16.mxu0 0
        %1064 = vmatpush1.bf16.msra.mxu0 %v1002
        %1065 = vmatprep.subr.bf16.mxu0 0
        %1066 = vmatpush1.bf16.msra.mxu0 %v1003
        %1067 = vmatprep.subr.bf16.mxu0 0
        %1068 = vmatpush1.bf16.msra.mxu0 %v1004
        %1069 = vmatprep.mubr.bf16.mxu0 %v870
        %1070 = vmatmul.mubr.bf16.gmra.mrb[0].mxu0 %v869
        %v1071 = vpop.f32.mrb[0].mxu0
        %v1072 = vadd.f32 0.0, %v1071
        %v1073 = vpop.f32.mrb[0].mxu0
        %v1074 = vpop.f32.mrb[0].mxu0
        %v1075 = vadd.f32 0.0, %v1074
        %v1076 = vpop.f32.mrb[0].mxu0
        %1077 = vmatprep.mubr.bf16.mxu0 %v873
        %1078 = vmatmul.mubr.bf16.gmra.mrb[0].mxu0 %v872
        %v1079 = vpop.f32.mrb[0].mxu0
        %v1080 = vadd.f32 0.0, %v1079
        %v1081 = vpop.f32.mrb[0].mxu0
        %v1082 = vpop.f32.mrb[0].mxu0
        %v1083 = vadd.f32 0.0, %v1082
        %v1084 = vpop.f32.mrb[0].mxu0
        %1085 = vmatprep.mubr.bf16.mxu0 %v876
        %1086 = vmatmul.mubr.bf16.gmra.mrb[0].mxu0 %v875
        %v1087 = vpop.f32.mrb[0].mxu0
        %v1088 = vadd.f32 0.0, %v1087
        %v1089 = vpop.f32.mrb[0].mxu0
        %v1090 = vpop.f32.mrb[0].mxu0
        %v1091 = vadd.f32 0.0, %v1090
        %v1092 = vpop.f32.mrb[0].mxu0
        %1093 = vmatprep.mubr.bf16.mxu0 %v879
        %1094 = vmatmul.mubr.bf16.gmra.mrb[0].mxu0 %v878
        %v1095 = vpop.f32.mrb[0].mxu0
        %v1096 = vadd.f32 0.0, %v1095
        %v1097 = vpop.f32.mrb[0].mxu0
        %v1098 = vpop.f32.mrb[0].mxu0
        %v1099 = vadd.f32 0.0, %v1098
        %v1100 = vpop.f32.mrb[0].mxu0
        %1101 = vdwg.mxu0
        %1102 = vmatprep.subr.bf16.mxu0 0
        %1103 = vmatpush1.bf16.msra.mxu0 %v1005
        %1104 = vmatprep.subr.bf16.mxu0 0
        %1105 = vmatpush1.bf16.msra.mxu0 %v1006
        %1106 = vmatprep.subr.bf16.mxu0 0
        %1107 = vmatpush1.bf16.msra.mxu0 0
        %1108 = vmatprep.subr.bf16.mxu0 0
        %1109 = vmatpush1.bf16.msra.mxu0 0
        %1110 = vmatprep.subr.bf16.mxu0 0
        %1111 = vmatpush1.bf16.msra.mxu0 0
        %1112 = vmatprep.subr.bf16.mxu0 0
        %1113 = vmatpush1.bf16.msra.mxu0 0
        %1114 = vmatprep.subr.bf16.mxu0 0
        %1115 = vmatpush1.bf16.msra.mxu0 0
        %1116 = vmatprep.subr.bf16.mxu0 0
        %1117 = vmatpush1.bf16.msra.mxu0 0
        %1118 = vmatprep.subr.bf16.mxu0 0
        %1119 = vmatpush1.bf16.msra.mxu0 0
        %1120 = vmatprep.subr.bf16.mxu0 0
        %1121 = vmatpush1.bf16.msra.mxu0 0
        %1122 = vmatprep.subr.bf16.mxu0 0
        %1123 = vmatpush1.bf16.msra.mxu0 0
        %1124 = vmatprep.subr.bf16.mxu0 0
        %1125 = vmatpush1.bf16.msra.mxu0 0
        %1126 = vmatprep.subr.bf16.mxu0 0
        %1127 = vmatpush1.bf16.msra.mxu0 0
        %1128 = vmatprep.subr.bf16.mxu0 0
        %1129 = vmatpush1.bf16.msra.mxu0 0
        %1130 = vmatprep.subr.bf16.mxu0 0
        %1131 = vmatpush1.bf16.msra.mxu0 0
        %1132 = vmatprep.subr.bf16.mxu0 0
        %1133 = vmatpush1.bf16.msra.mxu0 0
        %1134 = vmatprep.mubr.bf16.mxu0 0
        %1135 = vmatmul.mubr.bf16.gmra.mrb[0].mxu0 %v1026
        %v1136 = vpop.f32.mrb[0].mxu0
        %v1137 = vadd.f32 %v1072, %v1136
        %v1138 = vpop.f32.mrb[0].mxu0
        %v1139 = vpop.f32.mrb[0].mxu0
        %v1140 = vadd.f32 %v1075, %v1139
        %v1141 = vpop.f32.mrb[0].mxu0
        %1142 = vmatprep.mubr.bf16.mxu0 0
        %1143 = vmatmul.mubr.bf16.gmra.mrb[0].mxu0 %v1029
        %v1144 = vpop.f32.mrb[0].mxu0
        %v1145 = vadd.f32 %v1080, %v1144
        %v1146 = vpop.f32.mrb[0].mxu0
        %v1147 = vpop.f32.mrb[0].mxu0
        %v1148 = vadd.f32 %v1083, %v1147
        %v1149 = vpop.f32.mrb[0].mxu0
        %1150 = vmatprep.mubr.bf16.mxu0 0
        %1151 = vmatmul.mubr.bf16.gmra.mrb[0].mxu0 %v1032
        %v1152 = vpop.f32.mrb[0].mxu0
        %v1153 = vadd.f32 %v1088, %v1152
        %v1154 = vpop.f32.mrb[0].mxu0
        %v1155 = vpop.f32.mrb[0].mxu0
        %v1156 = vadd.f32 %v1091, %v1155
        %v1157 = vpop.f32.mrb[0].mxu0
        %1158 = vmatprep.mubr.bf16.mxu0 0
        %1159 = vmatmul.mubr.bf16.gmra.mrb[0].mxu0 %v1035
        %v1160 = vpop.f32.mrb[0].mxu0
        %v1161 = vadd.f32 %v1096, %v1160
        %v1162 = vpop.f32.mrb[0].mxu0
        %v1163 = vpop.f32.mrb[0].mxu0
        %v1164 = vadd.f32 %v1099, %v1163
        %v1165 = vpop.f32.mrb[0].mxu0
        %1166 = vdwg.mxu0
        %v1167 = vld [vmem:[%s5] sm:$0x1]
        %v1169 = vlaneseq
        %v1170 = vshrl.u32 %v1169, 7
        %v1171 = vsub.s32 0, %v1170
        %v1172 = vrot.slane %v1167, %v1171
        %v1174 = vmul.f32 %v1137, %v1172
        %v1175 = vmul.f32 %v1140, %v1172
        %v1176 = vmul.f32 %v1145, %v1172
        %v1177 = vmul.f32 %v1148, %v1172
        %v1178 = vmul.f32 %v1153, %v1172
        %v1179 = vmul.f32 %v1156, %v1172
        %v1180 = vmul.f32 %v1161, %v1172
        %v1181 = vmul.f32 %v1164, %v1172
        %v1182 = vld [vmem:[%s6] sm:$0x1]
        %v1184 = vlaneseq
        %v1185 = vshrl.u32 %v1184, 7
        %v1186 = vsub.s32 0, %v1185
        %v1187 = vrot.slane %v1182, %v1186
        %v1189 = vadd.f32 %v1174, %v1187
        %v1190 = vadd.f32 %v1175, %v1187
        %v1191 = vadd.f32 %v1176, %v1187
        %v1192 = vadd.f32 %v1177, %v1187
        %v1193 = vadd.f32 %v1178, %v1187
        %v1194 = vadd.f32 %v1179, %v1187
        %v1195 = vadd.f32 %v1180, %v1187
        %v1196 = vadd.f32 %v1181, %v1187
        %v1197 = vmax.f32 %v1189, 0.0
        %v1198 = vmax.f32 %v1190, 0.0
        %v1199 = vmax.f32 %v1191, 0.0
        %v1200 = vmax.f32 %v1192, 0.0
        %v1201 = vmax.f32 %v1193, 0.0
        %v1202 = vmax.f32 %v1194, 0.0
        %v1203 = vmax.f32 %v1195, 0.0
        %v1204 = vmax.f32 %v1196, 0.0
        %v1205 = vpack.c.bf16 %v1198, %v1197
        %v1206 = vpack.c.bf16 %v1200, %v1199
        %v1207 = vpack.c.bf16 %v1202, %v1201
        %v1208 = vpack.c.bf16 %v1204, %v1203
        %v1209 = vld [vmem:[%s7] sm:$0xf]
        %v1210 = vld [vmem:[%s7 + $0x4] sm:$0xf]
        %v1211 = vld [vmem:[%s7 + $0x8] sm:$0xf]
        %v1212 = vld [vmem:[%s7 + $0xc] sm:$0xf]
        %v1217 = vunpack.c.l.b16 %v1209
        %v1218 = vunpack.c.l.b16 %v1210
        %v1219 = vunpack.c.l.b16 %v1211
        %v1220 = vunpack.c.l.b16 %v1212
        %v1221 = vpack.c.b16 %v1218, %v1217
        %v1222 = vpack.c.b16 %v1220, %v1219
        %v1226 = vsel %vm818, %v1205, 0
        %v1229 = vsel %vm818, %v1206, 0
        %v1232 = vsel %vm818, %v1207, 0
        %v1235 = vsel %vm818, %v1208, 0
        %1237 = vmatprep.subr.bf16.mxu0 0
        %1238 = vmatpush1.bf16.msra.mxu0 %v1221
        %1239 = vmatprep.subr.bf16.mxu0 0
        %1240 = vmatpush1.bf16.msra.mxu0 %v1222
        %1241 = vmatprep.subr.bf16.mxu0 0
        %1242 = vmatpush1.bf16.msra.mxu0 0
        %1243 = vmatprep.subr.bf16.mxu0 0
        %1244 = vmatpush1.bf16.msra.mxu0 0
        %1245 = vmatprep.subr.bf16.mxu0 0
        %1246 = vmatpush1.bf16.msra.mxu0 0
        %1247 = vmatprep.subr.bf16.mxu0 0
        %1248 = vmatpush1.bf16.msra.mxu0 0
        %1249 = vmatprep.subr.bf16.mxu0 0
        %1250 = vmatpush1.bf16.msra.mxu0 0
        %1251 = vmatprep.subr.bf16.mxu0 0
        %1252 = vmatpush1.bf16.msra.mxu0 0
        %1253 = vmatprep.subr.bf16.mxu0 0
        %1254 = vmatpush1.bf16.msra.mxu0 0
        %1255 = vmatprep.subr.bf16.mxu0 0
        %1256 = vmatpush1.bf16.msra.mxu0 0
        %1257 = vmatprep.subr.bf16.mxu0 0
        %1258 = vmatpush1.bf16.msra.mxu0 0
        %1259 = vmatprep.subr.bf16.mxu0 0
        %1260 = vmatpush1.bf16.msra.mxu0 0
        %1261 = vmatprep.subr.bf16.mxu0 0
        %1262 = vmatpush1.bf16.msra.mxu0 0
        %1263 = vmatprep.subr.bf16.mxu0 0
        %1264 = vmatpush1.bf16.msra.mxu0 0
        %1265 = vmatprep.subr.bf16.mxu0 0
        %1266 = vmatpush1.bf16.msra.mxu0 0
        %1267 = vmatprep.subr.bf16.mxu0 0
        %1268 = vmatpush1.bf16.msra.mxu0 0
        %1269 = vmatprep.mubr.bf16.mxu0 0
        %1270 = vmatmul.mubr.bf16.gmra.mrb[0].mxu0 %v1226
        %v1271 = vpop.f32.mrb[0].mxu0
        %v1272 = vadd.f32 0.0, %v1271
        %v1273 = vpop.f32.mrb[0].mxu0
        %v1274 = vpop.f32.mrb[0].mxu0
        %v1275 = vadd.f32 0.0, %v1274
        %v1276 = vpop.f32.mrb[0].mxu0
        %1277 = vmatprep.mubr.bf16.mxu0 0
        %1278 = vmatmul.mubr.bf16.gmra.mrb[0].mxu0 %v1229
        %v1279 = vpop.f32.mrb[0].mxu0
        %v1280 = vadd.f32 0.0, %v1279
        %v1281 = vpop.f32.mrb[0].mxu0
        %v1282 = vpop.f32.mrb[0].mxu0
        %v1283 = vadd.f32 0.0, %v1282
        %v1284 = vpop.f32.mrb[0].mxu0
        %1285 = vmatprep.mubr.bf16.mxu0 0
        %1286 = vmatmul.mubr.bf16.gmra.mrb[0].mxu0 %v1232
        %v1287 = vpop.f32.mrb[0].mxu0
        %v1288 = vadd.f32 0.0, %v1287
        %v1289 = vpop.f32.mrb[0].mxu0
        %v1290 = vpop.f32.mrb[0].mxu0
        %v1291 = vadd.f32 0.0, %v1290
        %v1292 = vpop.f32.mrb[0].mxu0
        %1293 = vmatprep.mubr.bf16.mxu0 0
        %1294 = vmatmul.mubr.bf16.gmra.mrb[0].mxu0 %v1235
        %v1295 = vpop.f32.mrb[0].mxu0
        %v1296 = vadd.f32 0.0, %v1295
        %v1297 = vpop.f32.mrb[0].mxu0
        %v1298 = vpop.f32.mrb[0].mxu0
        %v1299 = vadd.f32 0.0, %v1298
        %v1300 = vpop.f32.mrb[0].mxu0
        %1301 = vdwg.mxu0
        %v1302 = vld [vmem:[%s8] sm:$0x1]
        %v1304 = vlaneseq
        %v1305 = vshrl.u32 %v1304, 7
        %v1306 = vsub.s32 0, %v1305
        %v1307 = vrot.slane %v1302, %v1306
        %v1309 = vmul.f32 %v1272, %v1307
        %v1310 = vmul.f32 %v1275, %v1307
        %v1311 = vmul.f32 %v1280, %v1307
        %v1312 = vmul.f32 %v1283, %v1307
        %v1313 = vmul.f32 %v1288, %v1307
        %v1314 = vmul.f32 %v1291, %v1307
        %v1315 = vmul.f32 %v1296, %v1307
        %v1316 = vmul.f32 %v1299, %v1307
        %v1317 = vld [vmem:[%s9] sm:$0x1]
        %v1319 = vlaneseq
        %v1320 = vshrl.u32 %v1319, 7
        %v1321 = vsub.s32 0, %v1320
        %v1322 = vrot.slane %v1317, %v1321
        %v1324 = vadd.f32 %v1309, %v1322
        %v1325 = vadd.f32 %v1310, %v1322
        %v1326 = vadd.f32 %v1311, %v1322
        %v1327 = vadd.f32 %v1312, %v1322
        %v1328 = vadd.f32 %v1313, %v1322
        %v1329 = vadd.f32 %v1314, %v1322
        %v1330 = vadd.f32 %v1315, %v1322
        %v1331 = vadd.f32 %v1316, %v1322
        %v1332 = vadd.f32 %v1324, %v359
        %v1333 = vadd.f32 %v1325, %v360
        %v1334 = vadd.f32 %v1326, %v361
        %v1335 = vadd.f32 %v1327, %v362
        %v1336 = vadd.f32 %v1328, %v363
        %v1337 = vadd.f32 %v1329, %v364
        %v1338 = vadd.f32 %v1330, %v365
        %v1339 = vadd.f32 %v1331, %v366
        %v1340 = vmax.f32 %v1332, 0.0
        %v1341 = vmax.f32 %v1333, 0.0
        %v1342 = vmax.f32 %v1334, 0.0
        %v1343 = vmax.f32 %v1335, 0.0
        %v1344 = vmax.f32 %v1336, 0.0
        %v1345 = vmax.f32 %v1337, 0.0
        %v1346 = vmax.f32 %v1338, 0.0
        %v1347 = vmax.f32 %v1339, 0.0
        %1348 = vst [vmem:[%s352] sm:$0xff] %v1340
        %1349 = vst [vmem:[%s352 + $0x8] sm:$0xff] %v1341
        %1350 = vst [vmem:[%s352 + $0x10] sm:$0xff] %v1342
        %1351 = vst [vmem:[%s352 + $0x18] sm:$0xff] %v1343
        %1352 = vst [vmem:[%s352 + $0x20] sm:$0xff] %v1344
        %1353 = vst [vmem:[%s352 + $0x28] sm:$0xff] %v1345
        %1354 = vst [vmem:[%s352 + $0x30] sm:$0xff] %v1346
        %1355 = vst [vmem:[%s352 + $0x38] sm:$0xff] %v1347
        %s1356 = sand.u32 %s247, 1
        %s1357 = scalar_lea.sflag [#allocation3], %s1356
        %s1358 = sand.u32 %s247, 1
        %s1359 = smul.addr %s1358, 64
        %s1360 = scalar_lea.vmem [#allocation2], %s1359
        // Predicated region
        $region61: #{bottleneck_pallas.1} parent=59 // pred_check
          %p1361 = pneg %p257
        $region62: #{bottleneck_pallas.1} parent=59 // pred_check_branch
          %1363 = sbr.rel (%p1361) target = $region64
        $region63: #{bottleneck_pallas.1} parent=59 // pred_region
          %s1365 = ssub.s32 1024, 1024
          %1366 = vsyncadd %s1357, %s1365
          %s1367 = smul.addr %s24, 8
          %s1368 = smul.addr %s1367, 128
          %s1369 = scalar_lea.hbm %s10, %s1368
          %s1370 = sshll.u32 %s1360, 4
          %s1371 = int_to_ptr.vmem [resolvable:$true] %s1370
          %1376 = dma.vmem_to_hbm [thread:$0]  %s1371, 1024, %s1369, %s1357, 128, 128, 8
        $region64: #{bottleneck_pallas.1} parent=59 // pred_fallthru
          _
      $region60: #{bottleneck_pallas.1} parent=5 // pred_fallthru
        _
      %p1377 = scmp.le.s32.totalorder 2, %s19
      // Predicated region
      $region65: #{bottleneck_pallas.1} parent=5 // pred_check
        %p1378 = pneg %p1377
      $region66: #{bottleneck_pallas.1} parent=5 // pred_check_branch
        %1380 = sbr.rel (%p1378) target = $region68
      $region67: #{bottleneck_pallas.1} parent=5 // pred_region
        %s1381 = ssub.s32 %s19, 2
        // Predicated region
        $region69: #{bottleneck_pallas.1} parent=67 // pred_check
          %p1382 = pneg %p263
        $region70: #{bottleneck_pallas.1} parent=67 // pred_check_branch
          %1384 = sbr.rel (%p1382) target = $region72
        $region71: #{bottleneck_pallas.1} parent=67 // pred_region
          %s1385 = sand.u32 %s248, 1
          %s1386 = scalar_lea.sflag [#allocation3], %s1385
          %s1387 = sand.u32 %s248, 1
          %s1388 = smul.addr %s1387, 64
          %s1389 = scalar_lea.vmem [#allocation2], %s1388
          %1390 = dma.done %s1386, 1024
        $region72: #{bottleneck_pallas.1} parent=67 // pred_fallthru
          _
      $region68: #{bottleneck_pallas.1} parent=5 // pred_fallthru
        _
    $region6: #{bottleneck_pallas.1} parent=1 // loop_footer
      %s23 = sadd.s32 1, %s19
    $region7: #{bottleneck_pallas.1} parent=1 // loop_footer_branch
      %18 = sbr.rel target = $region3
    $region8: #{bottleneck_pallas.1} parent=1 // loop_exit
      _
    %1391 = vsyncpa [#allocation3], 1
    %s1392 = scalar_lea.sflag [#allocation3], 1
    %1393 = vsyncpa %s1392, 1

</llo_original>
